<compile_context>
chip_gen: v5e
topology: v5e:2x2
jax: 0.10.0
libtpu: 0.0.40
codegen_flags: <defaults>
</compile_context>

<pallas_src>
import functools

import numpy as np

import jax
import jax.numpy as jnp
from jax.experimental import pallas as pl
from jax.experimental.pallas import tpu as pltpu


# ----------------------------------------------------------------------------
# helpers
# ----------------------------------------------------------------------------
def _round_up(x: int, m: int) -> int:
    return (x + m - 1) // m * m


def _pad2d(a, rows: int, cols: int):
    r, c = a.shape
    if r == rows and c == cols:
        return a
    return jnp.pad(a, ((0, rows - r), (0, cols - c)))


def _pick_tile(total: int, cap: int, unit: int) -> int:
    """Largest multiple of `unit` that is <= cap and divides `total`.

    `total` is assumed to be a multiple of `unit`, so `unit` always works.
    """
    t = min(cap, total)
    t -= t % unit
    while t >= unit:
        if total % t == 0:
            return t
        t -= unit
    return unit


def _row_unit_for(*dtypes) -> int:
    """Minimal sublane granularity for a set of streamed dtypes."""
    u = 8
    for dt in dtypes:
        isz = np.dtype(dt).itemsize
        if isz == 2:
            u = max(u, 16)
        elif isz == 1:
            u = max(u, 32)
    return u


@functools.lru_cache(maxsize=None)
def _vmem_limit_bytes() -> int:
    """Per-generation scoped-VMEM limit: ~3/4 of physical, capped at 100 MiB."""
    try:
        cap = int(pltpu.get_tpu_info().vmem_capacity_bytes)
    except Exception:
        cap = 64 * 1024 * 1024  # conservative (v7x physical)
    return max(32 * 1024 * 1024, min(cap * 3 // 4, 100 * 1024 * 1024))


# ----------------------------------------------------------------------------
# Kernel 1: forward()  — tiled linear projection head (MXU hot path)
# ----------------------------------------------------------------------------
def _linear_head_kernel_accout(x_ref, w_ref, b_ref, o_ref):
    """f32 output: accumulate directly into the resident output block."""
    k = pl.program_id(2)

    @pl.when(k == 0)
    def _():
        o_ref[...] = jnp.zeros_like(o_ref)

    o_ref[...] += jnp.dot(
        x_ref[...], w_ref[...], preferred_element_type=jnp.float32
    )

    @pl.when(k == pl.num_programs(2) - 1)
    def _():
        o_ref[...] += b_ref[...]


def _linear_head_kernel_cast(x_ref, w_ref, b_ref, o_ref, acc_ref):
    """Narrow output dtype: f32 VMEM accumulator, cast on the last k step."""
    k = pl.program_id(2)

    @pl.when(k == 0)
    def _():
        acc_ref[...] = jnp.zeros_like(acc_ref)

    acc_ref[...] += jnp.dot(
        x_ref[...], w_ref[...], preferred_element_type=jnp.float32
    )

    @pl.when(k == pl.num_programs(2) - 1)
    def _():
        o_ref[...] = (acc_ref[...] + b_ref[...]).astype(o_ref.dtype)


@functools.partial(jax.jit, static_argnames=("use_bf16_mxu", "out_dtype"))
def task_head_forward(x, w, b, *, use_bf16_mxu: bool = True, out_dtype=jnp.float32):
    """y = x @ W + b.  x:[B,d_in]  W:[d_in,d_out]  b:[1,d_out] -> [B,d_out].

    use_bf16_mxu=True feeds bf16 operands to the MXU (f32 accumulation),
    changing numerics at ~1e-2 relative; pass False for f32-exact inference.
    out_dtype=jnp.bfloat16 halves the pred HBM writeback for the loss path.
    """
    B, d_in = x.shape
    d_out = w.shape[-1]

    op_dtype = jnp.bfloat16 if use_bf16_mxu else jnp.float32
    out_is_f32 = np.dtype(out_dtype) == np.dtype(np.float32)
    row_unit = _row_unit_for(op_dtype, out_dtype)

    # Minimal hardware-granularity padding (NOT rounded up to full tiles).
    B_p = _round_up(B, row_unit)
    K_p = _round_up(d_in, 128)
    N_p = _round_up(d_out, 128)

    # Tiles: divisors of the padded dims.  For skinny heads keep the full
    # output width in one tile so each x tile streams from HBM exactly once.
    tm = _pick_tile(B_p, 512, row_unit)
    tn = N_p if N_p <= 1024 else _pick_tile(N_p, 512, 128)
    tk = _pick_tile(K_p, 1024, 128)

    # v7x megacore: keep the "parallel" (i, j) grid at >= 2 points when we can.
    if (B_p // tm) * (N_p // tn) == 1:
        if tm % (2 * row_unit) == 0:
            tm //= 2
        elif tn % 256 == 0:
            tn //= 2

    x_p = _pad2d(x.astype(op_dtype), B_p, K_p)
    w_p = _pad2d(w.astype(op_dtype), K_p, N_p)
    b_p = _pad2d(b.reshape(1, -1).astype(jnp.float32), 1, N_p)

    grid = (B_p // tm, N_p // tn, K_p // tk)

    kernel = _linear_head_kernel_accout if out_is_f32 else _linear_head_kernel_cast
    scratch = [] if out_is_f32 else [pltpu.VMEM((tm, tn), jnp.float32)]

    out = pl.pallas_call(
        kernel,
        out_shape=jax.ShapeDtypeStruct((B_p, N_p), out_dtype),
        grid_spec=pltpu.PrefetchScalarGridSpec(
            num_scalar_prefetch=0,
            grid=grid,
            in_specs=[
                pl.BlockSpec((tm, tk), lambda i, j, k: (i, k)),
                pl.BlockSpec((tk, tn), lambda i, j, k: (k, j)),
                pl.BlockSpec((1, tn), lambda i, j, k: (0, j)),
            ],
            out_specs=pl.BlockSpec((tm, tn), lambda i, j, k: (i, j)),
            scratch_shapes=scratch,
        ),
        compiler_params=pltpu.CompilerParams(
            dimension_semantics=("parallel", "parallel", "arbitrary"),
            vmem_limit_bytes=_vmem_limit_bytes(),
        ),
    )(x_p, w_p, b_p)

    return out[:B, :d_out]


# ----------------------------------------------------------------------------
# Kernel 2: compute_loss() — tiled masked-MSE partial sums
#   Kernel accumulates sum_b m*(p-t)^2 and sum_b m per output column; the
#   clamp/divide/mean finalize happens in the wrapper (cheap, [d_out]-sized).
#   Inputs stream at native dtype; elementwise math is f32 in-kernel.
# ----------------------------------------------------------------------------
def _masked_loss_sums_kernel(pred_ref, target_ref, mask_ref, sumsq_ref, cnt_ref):
    @pl.when(pl.program_id(1) == 0)
    def _():
        sumsq_ref[...] = jnp.zeros_like(sumsq_ref)
        cnt_ref[...] = jnp.zeros_like(cnt_ref)

    d = pred_ref[...].astype(jnp.float32) - target_ref[...].astype(jnp.float32)
    m = mask_ref[...].astype(jnp.float32)
    sumsq_ref[...] += jnp.sum(d * d * m, axis=0, keepdims=True)
    cnt_ref[...] += jnp.sum(m, axis=0, keepdims=True)


def _unmasked_loss_sums_kernel(pred_ref, target_ref, sumsq_ref):
    @pl.when(pl.program_id(1) == 0)
    def _():
        sumsq_ref[...] = jnp.zeros_like(sumsq_ref)

    d = pred_ref[...].astype(jnp.float32) - target_ref[...].astype(jnp.float32)
    sumsq_ref[...] += jnp.sum(d * d, axis=0, keepdims=True)


@jax.jit
def task_head_compute_loss(pred, target, mask=None):
    """Masked MSE. Returns (total_loss scalar, per_dim_loss [d_out])."""
    B, d_out = pred.shape

    if mask is not None and mask.dtype == jnp.bool_:
        mask = mask.astype(jnp.int8)  # exact for the binary-mask contract

    dts = [pred.dtype, target.dtype] + ([mask.dtype] if mask is not None else [])
    row_unit = _row_unit_for(*dts)

    B_p = _round_up(B, row_unit)          # reduction axis (minimal padding)
    D_p = _round_up(d_out, 128)           # lane-dense column axis

    tb = _pick_tile(B_p, 1024, row_unit)  # batch (reduction) tile
    tn = D_p if D_p <= 2048 else _pick_tile(D_p, 512, 128)
    # v7x megacore: column axis is the parallel one; keep >= 2 tiles if we can.
    if D_p // tn == 1 and tn % 256 == 0:
        tn //= 2

    pred_p = _pad2d(pred, B_p, D_p)       # native dtype, no wrapper upcast
    target_p = _pad2d(target, B_p, D_p)

    grid = (D_p // tn, B_p // tb)         # (parallel columns, arbitrary batch)
    in_spec = pl.BlockSpec((tb, tn), lambda j, i: (i, j))
    out_spec = pl.BlockSpec((1, tn), lambda j, i: (0, j))
    cparams = pltpu.CompilerParams(
        dimension_semantics=("parallel", "arbitrary"),
        vmem_limit_bytes=_vmem_limit_bytes(),
    )

    if mask is None:
        sumsq = pl.pallas_call(
            _unmasked_loss_sums_kernel,
            out_shape=jax.ShapeDtypeStruct((1, D_p), jnp.float32),
            grid_spec=pltpu.PrefetchScalarGridSpec(
                num_scalar_prefetch=0,
                grid=grid,
                in_specs=[in_spec, in_spec],
                out_specs=out_spec,
            ),
            compiler_params=cparams,
        )(pred_p, target_p)
        per_dim = sumsq[0, :d_out] / jnp.float32(max(B, 1))
    else:
        mask_p = _pad2d(mask, B_p, D_p)   # native dtype (int8 for bool masks)
        sumsq, cnt = pl.pallas_call(
            _masked_loss_sums_kernel,
            out_shape=(
                jax.ShapeDtypeStruct((1, D_p), jnp.float32),
                jax.ShapeDtypeStruct((1, D_p), jnp.float32),
            ),
            grid_spec=pltpu.PrefetchScalarGridSpec(
                num_scalar_prefetch=0,
                grid=grid,
                in_specs=[in_spec, in_spec, in_spec],
                out_specs=(out_spec, out_spec),
            ),
            compiler_params=cparams,
        )(pred_p, target_p, mask_p)
        per_dim = sumsq[0, :d_out] / jnp.maximum(cnt[0, :d_out], 1.0)

    total = per_dim.mean()
    return total, per_dim


# ----------------------------------------------------------------------------
# Parameter construction (deterministic, synthetic — no checkpoint load)
# ----------------------------------------------------------------------------
def make_task_head_params(key, d_in, d_out):
    kw, kb = jax.random.split(key)
    w = jax.random.normal(kw, (d_in, d_out), dtype=jnp.float32) * (1.0 / jnp.sqrt(d_in))
    b = jax.random.normal(kb, (1, d_out), dtype=jnp.float32) * 0.01
    return w, b


if __name__ == "__main__":
    key = jax.random.PRNGKey(0)
    k_x, k_p, k_t, k_m = jax.random.split(key, 4)

    batch, d_in, d_out = 8, 32, 8
    x = jax.random.normal(k_x, (batch, d_in), dtype=jnp.float32)
    w, b = make_task_head_params(k_p, d_in, d_out)

    # forward()  (bf16 MXU operands, f32 accumulation, f32 output)
    pred = task_head_forward(x, w, b)
    jax.block_until_ready(pred)

    ref = x @ w + b
    assert pred.shape == (batch, d_out)
    # bf16 MXU inputs => ~1e-2-level deviation from the pure-f32 reference.
    assert jnp.allclose(pred, ref, atol=5e-2, rtol=5e-2), "forward mismatch"

    # exact-precision sanity check of the tiled matmul path itself
    pred_f32 = task_head_forward(x, w, b, use_bf16_mxu=False)
    jax.block_until_ready(pred_f32)
    assert jnp.allclose(pred_f32, ref, atol=1e-5, rtol=1e-5), "forward(f32) mismatch"

    # forward() with non-128-multiple dims and a multi-tile (megacore-split) grid
    B2, K2, N2 = 192, 200, 72
    x2 = jax.random.normal(k_x, (B2, K2), dtype=jnp.float32)
    w2, b2 = make_task_head_params(k_p, K2, N2)
    pred2 = task_head_forward(x2, w2, b2, use_bf16_mxu=False)
    jax.block_until_ready(pred2)
    ref2 = x2 @ w2 + b2
    assert pred2.shape == (B2, N2)
    assert jnp.allclose(pred2, ref2, atol=1e-4, rtol=1e-4), "forward(odd dims) mismatch"

    # compute_loss() — masked path (f32 streams)
    target = jax.random.normal(k_t, (batch, d_out), dtype=jnp.float32)
    mask = (jax.random.uniform(k_m, (batch, d_out)) > 0.3).astype(jnp.float32)
    total_loss, per_dim_loss = task_head_compute_loss(pred_f32, target, mask)
    jax.block_until_ready((total_loss, per_dim_loss))

    sq = (pred_f32 - target) ** 2 * mask
    cnt = jnp.maximum(mask.sum(axis=0), 1.0)
    per_dim_ref = sq.sum(axis=0) / cnt
    total_ref = per_dim_ref.mean()
    assert jnp.allclose(per_dim_loss, per_dim_ref, atol=1e-5, rtol=1e-4), "per_dim mismatch"
    assert jnp.allclose(total_loss, total_ref, atol=1e-5, rtol=1e-4), "total mismatch"

    # compute_loss() — no-mask path, native bf16 streaming (upcast in kernel)
    pred_bf = pred_f32.astype(jnp.bfloat16)
    target_bf = target.astype(jnp.bfloat16)
    total_nm, per_dim_nm = task_head_compute_loss(pred_bf, target_bf, None)
    jax.block_until_ready((total_nm, per_dim_nm))
    d_bf = pred_bf.astype(jnp.float32) - target_bf.astype(jnp.float32)
    per_dim_nm_ref = (d_bf ** 2).mean(axis=0)
    assert jnp.allclose(per_dim_nm, per_dim_nm_ref, atol=1e-5, rtol=1e-4), "nomask per_dim mismatch"
    assert jnp.allclose(total_nm, per_dim_nm_ref.mean(), atol=1e-5, rtol=1e-4), "nomask total mismatch"

    print("KERNEL_OK")
</pallas_src>

<mosaic_0001>
module attributes {stable_mosaic.version = 11 : i64} {
  func.func @_linear_head_kernel_accout(%arg0: i32, %arg1: i32, %arg2: i32, %arg3: memref<16x128xbf16, #tpu.memory_space<vmem>>, %arg4: memref<128x128xbf16, #tpu.memory_space<vmem>>, %arg5: memref<1x128xf32, #tpu.memory_space<vmem>>, %arg6: memref<16x128xf32, #tpu.memory_space<vmem>>) attributes {dimension_semantics = [#tpu.dimension_semantics<parallel>, #tpu.dimension_semantics<parallel>, #tpu.dimension_semantics<arbitrary>], iteration_bounds = array<i64: 1, 1, 1>, scalar_prefetch = 0 : i64, scratch_operands = 0 : i64, tpu.core_type = #tpu.core_type<tc>, window_params = [{transform_indices = @transform_0, window_bounds = array<i64: 16, 128>}, {transform_indices = @transform_1, window_bounds = array<i64: 128, 128>}, {transform_indices = @transform_2, window_bounds = array<i64: 1, 128>}, {transform_indices = @transform_3, window_bounds = array<i64: 16, 128>}]} {
    %c0_i32 = arith.constant 0 : i32
    %0 = arith.cmpi eq, %arg2, %c0_i32 : i32
    %1 = arith.extui %0 : i1 to i32
    %c0_i32_0 = arith.constant 0 : i32
    %2 = arith.cmpi ne, %1, %c0_i32_0 : i32
    scf.if %2 {
      %cst_10 = arith.constant 0.000000e+00 : f32
      %12 = vector.broadcast %cst_10 : f32 to vector<16x128xf32>
      %c0_11 = arith.constant 0 : index
      %c0_12 = arith.constant 0 : index
      %13 = vector.load %arg6[%c0_11, %c0_12] : memref<16x128xf32, #tpu.memory_space<vmem>>, vector<16x128xf32>
      tpu.vector_store %arg6[%c0_11, %c0_12], %12 {strides = array<i32>} : memref<16x128xf32, #tpu.memory_space<vmem>>, vector<16x128xf32>,
    } else {
    }
    %c0 = arith.constant 0 : index
    %c0_1 = arith.constant 0 : index
    %3 = vector.load %arg6[%c0, %c0_1] : memref<16x128xf32, #tpu.memory_space<vmem>>, vector<16x128xf32>
    %c0_2 = arith.constant 0 : index
    %c0_3 = arith.constant 0 : index
    %4 = vector.load %arg3[%c0_2, %c0_3] : memref<16x128xbf16, #tpu.memory_space<vmem>>, vector<16x128xbf16>
    %c0_4 = arith.constant 0 : index
    %c0_5 = arith.constant 0 : index
    %5 = vector.load %arg4[%c0_4, %c0_5] : memref<128x128xbf16, #tpu.memory_space<vmem>>, vector<128x128xbf16>
    %cst = arith.constant dense<0.000000e+00> : vector<16x128xf32>
    %6 = tpu.matmul %4, %5, %cst {dimension_numbers = #tpu.dot_dimension_numbers<[1], [0], [0], [1], [0, 0, 1, 1], [], []>} : vector<16x128xbf16>, vector<128x128xbf16>, vector<16x128xf32> -> vector<16x128xf32>
    %7 = arith.addf %3, %6 : vector<16x128xf32>
    %c0_6 = arith.constant 0 : index
    %c0_7 = arith.constant 0 : index
    %8 = vector.load %arg6[%c0_6, %c0_7] : memref<16x128xf32, #tpu.memory_space<vmem>>, vector<16x128xf32>
    tpu.vector_store %arg6[%c0_6, %c0_7], %7 {strides = array<i32>} : memref<16x128xf32, #tpu.memory_space<vmem>>, vector<16x128xf32>,
    %c0_i32_8 = arith.constant 0 : i32
    %9 = arith.cmpi eq, %arg2, %c0_i32_8 : i32
    %10 = arith.extui %9 : i1 to i32
    %c0_i32_9 = arith.constant 0 : i32
    %11 = arith.cmpi ne, %10, %c0_i32_9 : i32
    scf.if %11 {
      %c0_10 = arith.constant 0 : index
      %c0_11 = arith.constant 0 : index
      %12 = vector.load %arg6[%c0_10, %c0_11] : memref<16x128xf32, #tpu.memory_space<vmem>>, vector<16x128xf32>
      %c0_12 = arith.constant 0 : index
      %c0_13 = arith.constant 0 : index
      %13 = vector.load %arg5[%c0_12, %c0_13] : memref<1x128xf32, #tpu.memory_space<vmem>>, vector<1x128xf32>
      %14 = vector.broadcast %13 : vector<1x128xf32> to vector<16x128xf32>
      %15 = arith.addf %12, %14 : vector<16x128xf32>
      %c0_14 = arith.constant 0 : index
      %c0_15 = arith.constant 0 : index
      %16 = vector.load %arg6[%c0_14, %c0_15] : memref<16x128xf32, #tpu.memory_space<vmem>>, vector<16x128xf32>
      tpu.vector_store %arg6[%c0_14, %c0_15], %15 {strides = array<i32>} : memref<16x128xf32, #tpu.memory_space<vmem>>, vector<16x128xf32>,
    } else {
    }
    return
  }
  func.func @transform_0(%arg0: i32, %arg1: i32, %arg2: i32) -> (i32, i32) {
    %c0_i32 = arith.constant 0 : i32
    return %arg0, %arg2 : i32, i32
  }
  func.func @transform_1(%arg0: i32, %arg1: i32, %arg2: i32) -> (i32, i32) {
    %c0_i32 = arith.constant 0 : i32
    return %arg2, %arg1 : i32, i32
  }
  func.func @transform_2(%arg0: i32, %arg1: i32, %arg2: i32) -> (i32, i32) {
    %c0_i32 = arith.constant 0 : i32
    %c0_i32_0 = arith.constant 0 : i32
    return %c0_i32, %arg1 : i32, i32
  }
  func.func @transform_3(%arg0: i32, %arg1: i32, %arg2: i32) -> (i32, i32) {
    %c0_i32 = arith.constant 0 : i32
    return %arg0, %arg1 : i32, i32
  }
}

</mosaic_0001>

<llo_original>
// kernel: task_head_forward.1
$region0: #{task_head_forward.1}
  #allocation0 [shape = 'u32[]', space=smem, size = 0x4, offset = 0x4, fixed_abs, tag = 'smem constant byte address 0x4 - core index']
  #allocation1 [shape = 'u32[72,128]{1,0:T(1,128)}', space=vmem, size = 0x9000, scoped, tag = 'internal scratch']
  %s0 = inlined_call_operand.vmem [shape: bf16[16,128], index: 0, kind: input, shape index: {}]
  %s1 = inlined_call_operand.vmem [shape: bf16[128,128], index: 1, kind: input, shape index: {}]
  %s2 = inlined_call_operand.vmem [shape: f32[1,128], index: 2, kind: input, shape index: {}]
  %s3 = inlined_call_operand.vmem [shape: f32[16,128], index: 3, kind: output, shape index: {}]
  %s4 = sld [smem:[#allocation0]]
  $region30: #{task_head_forward.1} parent=0
    _
  %s6 = ssub.s32 1, %s4
  %s7 = scalar_select 0, %s6, %s4
  // Predicated region
  $region2: #{task_head_forward.1} parent=0 // pred_check
    _
  $region3: #{task_head_forward.1} parent=0 // pred_check_branch
    %9 = sbr.rel (0) target = $region5
  $region4: #{task_head_forward.1} parent=0 // pred_region
    _
  $region5: #{task_head_forward.1} parent=0 // pred_fallthru
    _
  // Predicated region
  $region6: #{task_head_forward.1} parent=0 // pred_check
    _
  $region7: #{task_head_forward.1} parent=0 // pred_check_branch
    %11 = sbr.rel (0) target = $region9
  $region8: #{task_head_forward.1} parent=0 // pred_region
    _
  $region9: #{task_head_forward.1} parent=0 // pred_fallthru
    _
  // Predicated region
  $region10: #{task_head_forward.1} parent=0 // pred_check
    _
  $region11: #{task_head_forward.1} parent=0 // pred_check_branch
    %13 = sbr.rel (0) target = $region13
  $region12: #{task_head_forward.1} parent=0 // pred_region
    _
  $region13: #{task_head_forward.1} parent=0 // pred_fallthru
    _
  %p14 = scmp.eq.s32.totalorder 0, 0
  // Predicated region
  $region14: #{task_head_forward.1} parent=0 // pred_check
    %p15 = pneg %p14
  $region15: #{task_head_forward.1} parent=0 // pred_check_branch
    %17 = sbr.rel (%p15) target = $region17
  $region16: #{task_head_forward.1} parent=0 // pred_region
    %18 = vst [vmem:[%s3] sm:$0xff] 0.0
    %19 = vst [vmem:[%s3 + $0x8] sm:$0xff] 0.0
  $region17: #{task_head_forward.1} parent=0 // pred_fallthru
    _
  %v20 = vld [vmem:[%s3] sm:$0xff]
  %v21 = vld [vmem:[%s3 + $0x8] sm:$0xff]
  %v22 = vld [vmem:[%s0] sm:$0xf]
  %v23 = vld [vmem:[%s0 + $0x4] sm:$0xf]
  %v24 = vld [vmem:[%s1] sm:$0xf]
  %v25 = vld [vmem:[%s1 + $0x4] sm:$0xf]
  %v26 = vld [vmem:[%s1 + $0x8] sm:$0xf]
  %v27 = vld [vmem:[%s1 + $0xc] sm:$0xf]
  %v28 = vld [vmem:[%s1 + $0x10] sm:$0xf]
  %v29 = vld [vmem:[%s1 + $0x14] sm:$0xf]
  %v30 = vld [vmem:[%s1 + $0x18] sm:$0xf]
  %v31 = vld [vmem:[%s1 + $0x1c] sm:$0xf]
  %v32 = vld [vmem:[%s1 + $0x20] sm:$0xf]
  %v33 = vld [vmem:[%s1 + $0x24] sm:$0xf]
  %v34 = vld [vmem:[%s1 + $0x28] sm:$0xf]
  %v35 = vld [vmem:[%s1 + $0x2c] sm:$0xf]
  %v36 = vld [vmem:[%s1 + $0x30] sm:$0xf]
  %v37 = vld [vmem:[%s1 + $0x34] sm:$0xf]
  %v38 = vld [vmem:[%s1 + $0x38] sm:$0xf]
  %v39 = vld [vmem:[%s1 + $0x3c] sm:$0xf]
  %v42 = vunpack.c.l.b16 %v22
  %v43 = vunpack.c.l.b16 %v23
  %v44 = vpack.c.b16 %v43, %v42
  %v62 = vunpack.c.l.b16 %v24
  %v63 = vunpack.c.l.b16 %v25
  %v64 = vunpack.c.l.b16 %v26
  %v65 = vunpack.c.l.b16 %v27
  %v66 = vunpack.c.l.b16 %v28
  %v67 = vunpack.c.l.b16 %v29
  %v68 = vunpack.c.l.b16 %v30
  %v69 = vunpack.c.l.b16 %v31
  %v70 = vunpack.c.l.b16 %v32
  %v71 = vunpack.c.l.b16 %v33
  %v72 = vunpack.c.l.b16 %v34
  %v73 = vunpack.c.l.b16 %v35
  %v74 = vunpack.c.l.b16 %v36
  %v75 = vunpack.c.l.b16 %v37
  %v76 = vunpack.c.l.b16 %v38
  %v77 = vunpack.c.l.b16 %v39
  %v78 = vpack.c.b16 %v63, %v62
  %v79 = vpack.c.b16 %v65, %v64
  %v80 = vpack.c.b16 %v67, %v66
  %v81 = vpack.c.b16 %v69, %v68
  %v82 = vpack.c.b16 %v71, %v70
  %v83 = vpack.c.b16 %v73, %v72
  %v84 = vpack.c.b16 %v75, %v74
  %v85 = vpack.c.b16 %v77, %v76
  %94 = vmatpush.bf16.msra.mxu0 %v85
  %95 = vmatpush.bf16.msra.mxu0 %v84
  %96 = vmatpush.bf16.msra.mxu0 %v83
  %97 = vmatpush.bf16.msra.mxu0 %v82
  %98 = vmatpush.bf16.msra.mxu0 %v81
  %99 = vmatpush.bf16.msra.mxu0 %v80
  %100 = vmatpush.bf16.msra.mxu0 %v79
  %101 = vmatpush.bf16.msra.mxu0 %v78
  %102 = vmatmul.bf16.gmra.mxu0 %v44
  %v103 = vpop.f32.mrf.mxu0
  %v104 = vadd.f32 0.0, %v103
  %v105 = vpop.f32.mrf.mxu0
  %v106 = vadd.f32 0.0, %v105
  %107 = vdwg.mxu0
  %v108 = vadd.f32 %v20, %v104
  %v109 = vadd.f32 %v21, %v106
  %110 = vst [vmem:[%s3] sm:$0xff] %v108
  %111 = vst [vmem:[%s3 + $0x8] sm:$0xff] %v109
  // Predicated region
  $region18: #{task_head_forward.1} parent=0 // pred_check
    %p112 = pneg %p14
  $region19: #{task_head_forward.1} parent=0 // pred_check_branch
    %114 = sbr.rel (%p112) target = $region21
  $region20: #{task_head_forward.1} parent=0 // pred_region
    %v115 = vld [vmem:[%s3] sm:$0xff]
    %v116 = vld [vmem:[%s3 + $0x8] sm:$0xff]
    %v117 = vld [vmem:[%s2] sm:$0x1]
    %v119 = vperm.slane %v117, 0
    %v121 = vadd.f32 %v115, %v119
    %v122 = vadd.f32 %v116, %v119
    %123 = vst [vmem:[%s3] sm:$0xff] %v121
    %124 = vst [vmem:[%s3 + $0x8] sm:$0xff] %v122
  $region21: #{task_head_forward.1} parent=0 // pred_fallthru
    _
  // Predicated region
  $region22: #{task_head_forward.1} parent=0 // pred_check
    _
  $region23: #{task_head_forward.1} parent=0 // pred_check_branch
    %126 = sbr.rel (0) target = $region25
  $region24: #{task_head_forward.1} parent=0 // pred_region
    _
  $region25: #{task_head_forward.1} parent=0 // pred_fallthru
    _
  // Predicated region
  $region26: #{task_head_forward.1} parent=0 // pred_check
    _
  $region27: #{task_head_forward.1} parent=0 // pred_check_branch
    %128 = sbr.rel (0) target = $region29
  $region28: #{task_head_forward.1} parent=0 // pred_region
    _
  $region29: #{task_head_forward.1} parent=0 // pred_fallthru
    _

</llo_original>
